<compile_context>
chip_gen: v7x
topology: tpu7x:2x2x1
jax: 0.10.0
libtpu: 0.0.40
codegen_flags: <defaults>
</compile_context>

<pallas_src>
import functools

import jax
import jax.numpy as jnp
from jax.experimental import pallas as pl
from jax.experimental.pallas import tpu as pltpu


_TARGET_BLOCK_BYTES = 2 * 1024 * 1024  # ~2 MiB per buffer per grid step


def _round_up(v: int, m: int) -> int:
    return ((v + m - 1) // m) * m


def _act_quant_kernel(x_ref, o_ref, *, a_bit: int):
    # DMA in native dtype; upcast to f32 only for the arithmetic.
    x = x_ref[...].astype(jnp.float32)
    if a_bit == 1:
        # sign(clamp(x, 0, 1)) == 1.0 where x > 0 else 0.0
        q = jnp.where(x > 0.0, 1.0, 0.0)
    else:
        n = float(2 ** a_bit - 1)
        inv_n = 1.0 / n
        q = jnp.round(jnp.clip(x, 0.0, 1.0) * n) * inv_n
    o_ref[...] = q.astype(o_ref.dtype)


def activation_quantize(x: jax.Array, a_bit: int) -> jax.Array:
    """Elementwise activation quantization. x: any shape (e.g. NCHW)."""
    assert a_bit <= 8 or a_bit == 32

    if a_bit == 32:
        # Identity: skip the kernel entirely (no HBM read/write pass).
        return x

    orig_shape = x.shape
    orig_dtype = x.dtype
    total = x.size
    if total == 0:
        return x

    x_flat = jnp.ravel(x)

    # Pick the widest lane-dense width dividing the element count.
    lanes = None
    for cand in (2048, 1024, 512, 256, 128):
        if total % cand == 0 and total // cand >= 8:
            lanes = cand
            break

    pad = 0
    if lanes is None:
        # Awkward size: minimally pad to a multiple of 128 lanes.
        lanes = 128
        padded_total = _round_up(total, lanes)
        pad = padded_total - total
        if pad:
            x_flat = jnp.pad(x_flat, (0, pad))

    rows = x_flat.size // lanes
    x2d = x_flat.reshape(rows, lanes)

    # Block sizing: ~2 MiB per buffer, sublane-aligned (multiple of 8 rows).
    itemsize = jnp.dtype(x2d.dtype).itemsize
    block_rows = max(8, (_TARGET_BLOCK_BYTES // (lanes * itemsize)) // 8 * 8)
    block_rows = min(block_rows, _round_up(rows, 8))

    grid = (pl.cdiv(rows, block_rows),)
    kernel = functools.partial(_act_quant_kernel, a_bit=a_bit)

    out2d = pl.pallas_call(
        kernel,
        out_shape=jax.ShapeDtypeStruct((rows, lanes), x2d.dtype),
        grid_spec=pltpu.PrefetchScalarGridSpec(
            num_scalar_prefetch=0,
            grid=grid,
            in_specs=[pl.BlockSpec((block_rows, lanes), lambda i: (i, 0))],
            out_specs=pl.BlockSpec((block_rows, lanes), lambda i: (i, 0)),
        ),
        compiler_params=pltpu.CompilerParams(
            dimension_semantics=("parallel",),
        ),
        cost_estimate=pl.CostEstimate(
            flops=3 * total,
            transcendentals=0,
            bytes_accessed=2 * total * itemsize,
        ),
    )(x2d)

    out_flat = out2d.reshape(-1)
    if pad:
        out_flat = out_flat[:total]
    return out_flat.reshape(orig_shape).astype(orig_dtype)


def _reference(x, a_bit):
    if a_bit == 32:
        return x
    xc = jnp.clip(x, 0.0, 1.0)
    if a_bit == 1:
        return jnp.sign(xc)
    n = float(2 ** a_bit - 1)
    return jnp.round(xc * n) / n


if __name__ == "__main__":
    key = jax.random.PRNGKey(0)
    ok = True

    # NCHW conv-style activation (lane-dense path, no padding).
    k0, k1, k2 = jax.random.split(key, 3)
    test_inputs = [
        jax.random.normal(k0, (2, 4, 16, 16), dtype=jnp.float32),  # divisible
        jax.random.normal(k1, (2, 4, 40, 40), dtype=jnp.float32),  # ragged last block
        jax.random.normal(k2, (2, 3, 7, 11), dtype=jnp.float32),   # needs tiny pad
    ]

    for x in test_inputs:
        for a_bit in (2, 4, 8, 1, 32):
            y = activation_quantize(x, a_bit)
            y = jax.block_until_ready(y)
            y_ref = _reference(x, a_bit)
            if not jnp.allclose(y, y_ref, atol=1e-6):
                ok = False
                print(f"MISMATCH at shape={x.shape} a_bit={a_bit}")

    if ok:
        print("KERNEL_OK")
</pallas_src>

<mosaic_0001>
module attributes {stable_mosaic.version = 11 : i64} {
  func.func @_act_quant_kernel(%arg0: i32, %arg1: memref<8x256xf32, #tpu.memory_space<vmem>>, %arg2: memref<8x256xf32, #tpu.memory_space<vmem>>) attributes {dimension_semantics = [#tpu.dimension_semantics<parallel>], iteration_bounds = array<i64: 1>, scalar_prefetch = 0 : i64, scratch_operands = 0 : i64, tpu.core_type = #tpu.core_type<tc>, window_params = [{transform_indices = @transform_0, window_bounds = array<i64: 8, 256>}, {transform_indices = @transform_1, window_bounds = array<i64: 8, 256>}]} {
    %c0 = arith.constant 0 : index
    %c0_0 = arith.constant 0 : index
    %0 = vector.load %arg1[%c0, %c0_0] : memref<8x256xf32, #tpu.memory_space<vmem>>, vector<8x256xf32>
    %cst = arith.constant 0.000000e+00 : f32
    %cst_1 = arith.constant 1.000000e+00 : f32
    %1 = vector.broadcast %cst : f32 to vector<8x256xf32>
    %2 = arith.maximumf %1, %0 : vector<8x256xf32>
    %3 = vector.broadcast %cst_1 : f32 to vector<8x256xf32>
    %4 = arith.minimumf %3, %2 : vector<8x256xf32>
    %cst_2 = arith.constant 3.000000e+00 : f32
    %5 = vector.broadcast %cst_2 : f32 to vector<8x256xf32>
    %6 = arith.mulf %4, %5 : vector<8x256xf32>
    %7 = math.roundeven %6 : vector<8x256xf32>
    %cst_3 = arith.constant 0.333333343 : f32
    %8 = vector.broadcast %cst_3 : f32 to vector<8x256xf32>
    %9 = arith.mulf %7, %8 : vector<8x256xf32>
    %c0_4 = arith.constant 0 : index
    %c0_5 = arith.constant 0 : index
    %10 = vector.load %arg2[%c0_4, %c0_5] : memref<8x256xf32, #tpu.memory_space<vmem>>, vector<8x256xf32>
    tpu.vector_store %arg2[%c0_4, %c0_5], %9 {strides = array<i32>} : memref<8x256xf32, #tpu.memory_space<vmem>>, vector<8x256xf32>,
    return
  }
  func.func @transform_0(%arg0: i32) -> (i32, i32) {
    %c0_i32 = arith.constant 0 : i32
    %c0_i32_0 = arith.constant 0 : i32
    return %arg0, %c0_i32 : i32, i32
  }
  func.func @transform_1(%arg0: i32) -> (i32, i32) {
    %c0_i32 = arith.constant 0 : i32
    %c0_i32_0 = arith.constant 0 : i32
    return %arg0, %c0_i32 : i32, i32
  }
}

</mosaic_0001>

<llo_original>
// kernel: tpu_custom_call.1
$region0: #{tpu_custom_call.1}
  #allocation0 [shape = 'u32[]', space=smem, size = 0x4, offset = 0x4, fixed_abs, tag = 'smem constant byte address 0x4 - core index']
  #allocation1 [shape = 'u32[144,128]{1,0:T(1,128)}', space=vmem, size = 0x12000, scoped, tag = 'internal scratch']
  %s0 = inlined_call_operand.hbm [shape: f32[8,256], index: 0, kind: input, shape index: {}]
  %s1 = inlined_call_operand.hbm [shape: f32[8,256], index: 1, kind: output, shape index: {}]
  %s2 = sld [smem:[#allocation0]]
  $region18: #{tpu_custom_call.1} parent=0
    _
  %s4 = ssub.s32 1, %s2
  %s5 = scalar_select 0, %s4, %s2
  $region1: #{tpu_custom_call.1} parent=0
    #allocation2 [shape = 'u8[8192]{0}', space=vmem, size = 0x2000, scoped, tag = 'input window, operand 0, single buffered']
    #allocation3 [shape = 's32[1]{0}', space=sflag, size = 0x4, scoped, tag = 'scoped memory for tpu_custom_call.1']
    #allocation4 [shape = 's32[1]{0}', space=sflag, size = 0x4, scoped, tag = 'scoped memory for tpu_custom_call.1']
    #allocation5 [shape = 'u8[8192]{0}', space=vmem, size = 0x2000, scoped, tag = 'output window, operand 0, single buffered']
    %6 = vsyncpa [#allocation3], 0
    %7 = vsyncpa [#allocation4], 0
    // Predicated region
    $region2: #{tpu_custom_call.1} parent=1 // pred_check
      _
    $region3: #{tpu_custom_call.1} parent=1 // pred_check_branch
      %9 = sbr.rel (0) target = $region5
    $region4: #{tpu_custom_call.1} parent=1 // pred_region
      %s11 = ssub.s32 256, 256
      %12 = vsyncadd [#allocation3], %s11
      %s14 = sshll.u32 [#allocation2], 4
      %s15 = int_to_ptr.vmem [resolvable:$true] %s14
      %17 = dma.hbm_to_vmem [thread:$0]  %s0, 256, %s15, [#allocation3]
    $region5: #{tpu_custom_call.1} parent=1 // pred_fallthru
      _
    // Predicated region
    $region6: #{tpu_custom_call.1} parent=1 // pred_check
      _
    $region7: #{tpu_custom_call.1} parent=1 // pred_check_branch
      %19 = sbr.rel (0) target = $region9
    $region8: #{tpu_custom_call.1} parent=1 // pred_region
      %20 = dma.done [#allocation3], 256
    $region9: #{tpu_custom_call.1} parent=1 // pred_fallthru
      _
    %v21 = vld [vmem:[#allocation2] sm:$0xff]
    %v22 = vld [vmem:[#allocation2 + $0x8] sm:$0xff]
    %v23 = vmax.f32 %v21, 0.0
    %v24 = vmax.f32 %v22, 0.0
    %v25 = vmin.f32 %v23, 1.0
    %v26 = vmin.f32 %v24, 1.0
    %v27 = vmul.f32 %v25, 3.0
    %v28 = vmul.f32 %v26, 3.0
    %v29 = vround.ne.pseudo %v27
    %v30 = vround.ne.pseudo %v28
    %v31 = vmul.f32 %v29, 0.33333334
    %v32 = vmul.f32 %v30, 0.33333334
    %33 = vst [vmem:[#allocation5] sm:$0xff] %v31
    %34 = vst [vmem:[#allocation5 + $0x8] sm:$0xff] %v32
    // Predicated region
    $region10: #{tpu_custom_call.1} parent=1 // pred_check
      _
    $region11: #{tpu_custom_call.1} parent=1 // pred_check_branch
      %36 = sbr.rel (0) target = $region13
    $region12: #{tpu_custom_call.1} parent=1 // pred_region
      %s38 = ssub.s32 256, 256
      %39 = vsyncadd [#allocation4], %s38
      %s41 = sshll.u32 [#allocation5], 4
      %s42 = int_to_ptr.vmem [resolvable:$true] %s41
      %44 = dma.vmem_to_hbm [thread:$0]  %s42, 256, %s1, [#allocation4]
    $region13: #{tpu_custom_call.1} parent=1 // pred_fallthru
      _
    // Predicated region
    $region14: #{tpu_custom_call.1} parent=1 // pred_check
      _
    $region15: #{tpu_custom_call.1} parent=1 // pred_check_branch
      %46 = sbr.rel (0) target = $region17
    $region16: #{tpu_custom_call.1} parent=1 // pred_region
      %47 = dma.done [#allocation4], 256
    $region17: #{tpu_custom_call.1} parent=1 // pred_fallthru
      _
    %48 = vsyncpa [#allocation3], 1
    %49 = vsyncpa [#allocation4], 1

</llo_original>
